<compile_context>
chip_gen: v6e
topology: v6e:2x2x1
jax: 0.10.0
libtpu: 0.0.40
codegen_flags: <defaults>
</compile_context>

<pallas_src>
import functools

import jax
import jax.numpy as jnp
from jax import lax
from jax.experimental import pallas as pl
from jax.experimental.pallas import tpu as pltpu

_SUBLANES = 8


def _tpu_kind():
    try:
        dev = jax.devices()[0]
        if dev.platform != "tpu":
            return ""
        return str(getattr(dev, "device_kind", "")).lower()
    except Exception:
        return ""


def _tensorcores_per_device():
    """Best-effort count of TensorCores behind one JAX device (v7x/megacore: 2)."""
    try:
        dev = jax.devices()[0]
        for attr in ("num_cores", "core_count"):
            v = getattr(dev, attr, None)
            if isinstance(v, int) and 1 <= v <= 8:
                return v
    except Exception:
        pass
    kind = _tpu_kind()
    if any(tag in kind for tag in ("v7", "v4", "v5p")):
        return 2
    return 1


def _target_block_bytes():
    """Per-input block-size target that fits the default scoped-VMEM budget
    with double buffering (2 inputs x 2 buffers + tiny output)."""
    kind = _tpu_kind()
    if "v6" in kind or "v7" in kind:
        return 4 * 1024 * 1024   # 16 MiB double-buffered < 32 MiB default
    return 2 * 1024 * 1024       # 8 MiB double-buffered < v5e's 16 MiB default


def _canon_dtype(x):
    # Keep f32 / bf16 in their native dtype (bf16 halves HBM bytes; the upcast
    # to f32 happens in-kernel).  Everything else is cast to f32 once here.
    if x.dtype.name in ("float32", "bfloat16"):
        return x
    return x.astype(jnp.float32)


def _as_2d(x):
    """(d0,...,dk,C) -> (prod(leading), C): collapse leading dims only.

    Keeping the native last dim as the lane dim avoids the flatten/pad/repack
    relayout passes the previous version paid before the kernel even ran."""
    if x.ndim == 0:
        return x.reshape(1, 1)
    if x.ndim == 1:
        n = x.shape[0]
        if n >= 128 and n % 128 == 0:
            return x.reshape(n // 128, 128)
        return x.reshape(1, n)
    if x.ndim == 2:
        return x
    return x.reshape(-1, x.shape[-1])


def _hinge_kernel(eps_ref, r_ref, l_ref, o_ref, *,
                  total_rows, row_tile, steps, may_need_mask):
    """Accumulate sum(relu(eps - r*l)) over one (row_tile, C) block into the
    chunk's resident (1,1) output block."""
    c = pl.program_id(0)           # chunk (TensorCore) index  -- "parallel"
    j = pl.program_id(1)           # step within chunk         -- "arbitrary"

    @pl.when(j == 0)
    def _init():
        o_ref[...] = jnp.zeros_like(o_ref)

    eps = eps_ref[0]
    rv = r_ref[...].astype(jnp.float32)     # no-op for f32, upcast for bf16
    lv = l_ref[...].astype(jnp.float32)
    h = jnp.maximum(eps - rv * lv, 0.0)

    if not may_need_mask:
        # Every block is fully in-bounds: no masking code is emitted at all.
        o_ref[...] = o_ref[...] + jnp.sum(h)
    else:
        rows_done = (c * steps + j) * row_tile        # logical rows before tile
        is_full = rows_done + row_tile <= total_rows

        @pl.when(is_full)
        def _full():
            o_ref[...] = o_ref[...] + jnp.sum(h)

        @pl.when(jnp.logical_not(is_full))
        def _tail():
            # Ragged last tile of the array and/or the (DMA-deduplicated)
            # over-coverage step of an imbalanced chunk.  `where` (not mul)
            # so stale/padded VMEM garbage (possibly NaN) never leaks in.
            row_idx = lax.broadcasted_iota(jnp.int32, h.shape, 0)
            valid = row_idx < (total_rows - rows_done)
            o_ref[...] = o_ref[...] + jnp.sum(jnp.where(valid, h, 0.0))


def hinge_like_loss(results, labels, epsilon=1.0, *, row_tile=None, num_chunks=None):
    """sum(relu(epsilon - results * labels)) over all elements -> f32 scalar.

    `row_tile` / `num_chunks` exist only to force multi-tile / two-chunk paths
    in tests; leave as None in normal use."""
    r = jnp.asarray(results)
    l = jnp.asarray(labels)
    if r.shape != l.shape:
        r, l = jnp.broadcast_arrays(r, l)
    r = _canon_dtype(r)
    l = _canon_dtype(l)

    r2 = _as_2d(r)
    l2 = _as_2d(l)
    if r2.size == 0:
        return jnp.zeros((), jnp.float32)
    R, C = r2.shape

    itemsize_max = max(r2.dtype.itemsize, l2.dtype.itemsize)
    itemsize_min = min(r2.dtype.itemsize, l2.dtype.itemsize)
    row_align = _SUBLANES * max(1, 4 // itemsize_min)   # 8 for f32, 16 for bf16
    budget_rows = max(
        row_align,
        (_target_block_bytes() // (C * itemsize_max)) // row_align * row_align)

    if row_tile is None:
        row_tile = R if R <= budget_rows else budget_rows
    else:
        row_tile = min(int(row_tile), R)
        if row_tile < R and row_tile % row_align != 0:
            raise ValueError(
                f"row_tile must be a multiple of {row_align} when it tiles the rows")
    num_tiles = -(-R // row_tile)

    if num_chunks is None:
        # Split across two chunks only when a second TensorCore can take it
        # (v7x / megacore), or when there is plenty of work so the tiny extra
        # per-chunk epilogue is noise even on a single-TC part.
        two_tc = _tensorcores_per_device() >= 2
        num_chunks = 2 if (num_tiles >= 2 and (two_tc or num_tiles >= 8)) else 1
    num_chunks = max(1, min(int(num_chunks), num_tiles))
    steps = -(-num_tiles // num_chunks)

    if num_chunks * steps * row_tile >= 2 ** 31:
        raise ValueError(
            "hinge_like_loss: >=2^31 rows per call would overflow int32 row-index "
            "arithmetic; split the input across multiple calls.")

    last_tile = num_tiles - 1

    def tile_map(c, j):
        # Clamp: an over-coverage step (imbalanced 2-way split) repeats the
        # previous step's block index, so the pipeline does not re-DMA it; its
        # contribution is masked to zero inside the kernel.
        return (jnp.minimum(c * steps + j, last_tile), 0)

    eps_arr = jnp.full((1,), epsilon, jnp.float32)
    kernel = functools.partial(
        _hinge_kernel, total_rows=R, row_tile=row_tile, steps=steps,
        may_need_mask=(num_chunks * steps * row_tile > R))

    partials = pl.pallas_call(
        kernel,
        out_shape=jax.ShapeDtypeStruct((num_chunks, 1), jnp.float32),
        grid_spec=pltpu.PrefetchScalarGridSpec(
            num_scalar_prefetch=0,
            grid=(num_chunks, steps),
            in_specs=[
                pl.BlockSpec(memory_space=pltpu.MemorySpace.SMEM),   # epsilon
                pl.BlockSpec((row_tile, C), tile_map),               # results
                pl.BlockSpec((row_tile, C), tile_map),               # labels
            ],
            out_specs=pl.BlockSpec((1, 1), lambda c, j: (c, 0)),
        ),
        compiler_params=pltpu.CompilerParams(
            # "parallel" lets megacore parts (v7x) shard the chunk axis across
            # TensorCores; the reduction axis stays "arbitrary".
            dimension_semantics=("parallel", "arbitrary"),
        ),
    )(eps_arr, r2, l2)

    return jnp.sum(partials)


if __name__ == "__main__":
    key = jax.random.PRNGKey(0)
    k1, k2, k3, k4, k5, k6 = jax.random.split(key, 6)

    # 1) Primary check: classifier "results" and +/-1 "labels", shape (2, 4, 16, 16).
    results = jax.random.normal(k1, (2, 4, 16, 16), dtype=jnp.float32)
    labels = jnp.sign(jax.random.normal(k2, (2, 4, 16, 16), dtype=jnp.float32))
    labels = jnp.where(labels == 0, 1.0, labels)
    loss = jax.block_until_ready(hinge_like_loss(results, labels, epsilon=1.0))
    ref = jnp.sum(jnp.maximum(1.0 - results * labels, 0.0))
    assert jnp.allclose(loss, ref, rtol=1e-5, atol=1e-5), (loss, ref)

    # 2) Ragged shape whose last dim is not lane-friendly (no flatten/pad needed).
    r_small = jax.random.normal(k3, (2, 3, 7, 5), dtype=jnp.float32)
    l_small = jax.random.normal(k4, (2, 3, 7, 5), dtype=jnp.float32)
    loss_s = jax.block_until_ready(hinge_like_loss(r_small, l_small, epsilon=0.5))
    ref_s = jnp.sum(jnp.maximum(0.5 - r_small * l_small, 0.0))
    assert jnp.allclose(loss_s, ref_s, rtol=1e-5, atol=1e-5), (loss_s, ref_s)

    # 3) Multi-tile / two-chunk / ragged-row-tail / clamped-duplicate-step path
    #    (forced small tiles), plus the default auto-tiled path on the same data.
    r_big = jax.random.normal(k5, (5000, 128), dtype=jnp.float32)
    l_big = jnp.sign(jax.random.normal(k6, (5000, 128), dtype=jnp.float32))
    l_big = jnp.where(l_big == 0, 1.0, l_big)
    ref_b = jnp.sum(jnp.maximum(1.0 - r_big * l_big, 0.0))
    loss_b = jax.block_until_ready(
        hinge_like_loss(r_big, l_big, epsilon=1.0, row_tile=1024, num_chunks=2))
    assert jnp.allclose(loss_b, ref_b, rtol=1e-4), (loss_b, ref_b)
    loss_b2 = jax.block_until_ready(hinge_like_loss(r_big, l_big, epsilon=1.0))
    assert jnp.allclose(loss_b2, ref_b, rtol=1e-4), (loss_b2, ref_b)

    # 4) bf16 input path: native-dtype HBM blocks, f32 math in-kernel.
    r_bf = results.astype(jnp.bfloat16)
    l_bf = labels.astype(jnp.bfloat16)
    loss_bf = jax.block_until_ready(hinge_like_loss(r_bf, l_bf, epsilon=1.0))
    ref_bf = jnp.sum(jnp.maximum(
        1.0 - r_bf.astype(jnp.float32) * l_bf.astype(jnp.float32), 0.0))
    assert jnp.allclose(loss_bf, ref_bf, rtol=1e-5, atol=1e-5), (loss_bf, ref_bf)

    print("KERNEL_OK")
</pallas_src>

<mosaic_0001>
module attributes {stable_mosaic.version = 11 : i64} {
  func.func @_hinge_kernel(%arg0: i32, %arg1: i32, %arg2: memref<1xf32, #tpu.memory_space<smem>>, %arg3: memref<128x16xf32, #tpu.memory_space<vmem>>, %arg4: memref<128x16xf32, #tpu.memory_space<vmem>>, %arg5: memref<1x1xf32, #tpu.memory_space<vmem>>) attributes {dimension_semantics = [#tpu.dimension_semantics<parallel>, #tpu.dimension_semantics<arbitrary>], iteration_bounds = array<i64: 1, 1>, scalar_prefetch = 0 : i64, scratch_operands = 0 : i64, tpu.core_type = #tpu.core_type<tc>, window_params = [{transform_indices = @transform_0, window_bounds = array<i64: 1>}, {transform_indices = @transform_1, window_bounds = array<i64: 128, 16>}, {transform_indices = @transform_2, window_bounds = array<i64: 128, 16>}, {transform_indices = @transform_3, window_bounds = array<i64: 1, 1>}]} {
    %c0_i32 = arith.constant 0 : i32
    %0 = arith.cmpi eq, %arg1, %c0_i32 : i32
    %1 = arith.extui %0 : i1 to i32
    %c0_i32_0 = arith.constant 0 : i32
    %2 = arith.cmpi ne, %1, %c0_i32_0 : i32
    scf.if %2 {
      %cst_10 = arith.constant 0.000000e+00 : f32
      %19 = vector.broadcast %cst_10 : f32 to vector<1x1xf32>
      %c0_11 = arith.constant 0 : index
      %c0_12 = arith.constant 0 : index
      %20 = vector.load %arg5[%c0_11, %c0_12] : memref<1x1xf32, #tpu.memory_space<vmem>>, vector<1x1xf32>
      tpu.vector_store %arg5[%c0_11, %c0_12], %19 {strides = array<i32>} : memref<1x1xf32, #tpu.memory_space<vmem>>, vector<1x1xf32>,
    } else {
    }
    %c0 = arith.constant 0 : index
    %3 = memref.load %arg2[%c0] : memref<1xf32, #tpu.memory_space<smem>>
    %c0_1 = arith.constant 0 : index
    %c0_2 = arith.constant 0 : index
    %4 = vector.load %arg3[%c0_1, %c0_2] : memref<128x16xf32, #tpu.memory_space<vmem>>, vector<128x16xf32>
    %c0_3 = arith.constant 0 : index
    %c0_4 = arith.constant 0 : index
    %5 = vector.load %arg4[%c0_3, %c0_4] : memref<128x16xf32, #tpu.memory_space<vmem>>, vector<128x16xf32>
    %6 = arith.mulf %4, %5 : vector<128x16xf32>
    %7 = vector.broadcast %3 : f32 to vector<128x16xf32>
    %8 = arith.subf %7, %6 : vector<128x16xf32>
    %cst = arith.constant 0.000000e+00 : f32
    %9 = vector.broadcast %cst : f32 to vector<128x16xf32>
    %10 = arith.maximumf %8, %9 : vector<128x16xf32>
    %c0_5 = arith.constant 0 : index
    %c0_6 = arith.constant 0 : index
    %11 = vector.load %arg5[%c0_5, %c0_6] : memref<1x1xf32, #tpu.memory_space<vmem>>, vector<1x1xf32>
    %12 = vector.shape_cast %10 : vector<128x16xf32> to vector<1x128x16xf32>
    %cst_7 = arith.constant dense<0.000000e+00> : vector<1xf32>
    %13 = vector.multi_reduction <add>, %12, %cst_7 [1, 2] : vector<1x128x16xf32> to vector<1xf32>
    %14 = vector.shape_cast %13 : vector<1xf32> to vector<1x1x1xf32>
    %15 = vector.extract %14[0, 0, 0] : f32 from vector<1x1x1xf32>
    %16 = vector.broadcast %15 : f32 to vector<1x1xf32>
    %17 = arith.addf %11, %16 : vector<1x1xf32>
    %c0_8 = arith.constant 0 : index
    %c0_9 = arith.constant 0 : index
    %18 = vector.load %arg5[%c0_8, %c0_9] : memref<1x1xf32, #tpu.memory_space<vmem>>, vector<1x1xf32>
    tpu.vector_store %arg5[%c0_8, %c0_9], %17 {strides = array<i32>} : memref<1x1xf32, #tpu.memory_space<vmem>>, vector<1x1xf32>,
    return
  }
  func.func @transform_0(%arg0: i32, %arg1: i32) -> i32 {
    %c0_i32 = arith.constant 0 : i32
    %c0_i32_0 = arith.constant 0 : i32
    return %c0_i32 : i32
  }
  func.func @transform_1(%arg0: i32, %arg1: i32) -> (i32, i32) {
    %c1_i32 = arith.constant 1 : i32
    %0 = arith.muli %arg0, %c1_i32 : i32
    %1 = arith.addi %0, %arg1 : i32
    %c0_i32 = arith.constant 0 : i32
    %2 = arith.minsi %1, %c0_i32 : i32
    %c0_i32_0 = arith.constant 0 : i32
    %c0_i32_1 = arith.constant 0 : i32
    return %2, %c0_i32_0 : i32, i32
  }
  func.func @transform_2(%arg0: i32, %arg1: i32) -> (i32, i32) {
    %c1_i32 = arith.constant 1 : i32
    %0 = arith.muli %arg0, %c1_i32 : i32
    %1 = arith.addi %0, %arg1 : i32
    %c0_i32 = arith.constant 0 : i32
    %2 = arith.minsi %1, %c0_i32 : i32
    %c0_i32_0 = arith.constant 0 : i32
    %c0_i32_1 = arith.constant 0 : i32
    return %2, %c0_i32_0 : i32, i32
  }
  func.func @transform_3(%arg0: i32, %arg1: i32) -> (i32, i32) {
    %c0_i32 = arith.constant 0 : i32
    %c0_i32_0 = arith.constant 0 : i32
    return %arg0, %c0_i32 : i32, i32
  }
}

</mosaic_0001>

<llo_original>
// kernel: tpu_custom_call.1
$region0: #{tpu_custom_call.1}
  #allocation0 [shape = 'u32[]', space=smem, size = 0x4, offset = 0x4, fixed_abs, tag = 'smem constant byte address 0x4 - core index']
  #allocation1 [shape = 'u32[144,128]{1,0:T(1,128)}', space=vmem, size = 0x12000, scoped, tag = 'internal scratch']
  #allocation2 [shape = 'f32[1]{0:T(128)S(6)}', space=smem, size = 0x200, scoped, tag = 'scoped memory for tpu_custom_call.1']
  %s0 = inlined_call_operand.<no memory space> [shape: f32[1], index: 0, kind: input, shape index: {}]
  %s1 = inlined_call_operand.vmem [shape: f32[128,16], index: 1, kind: input, shape index: {}]
  %s2 = inlined_call_operand.vmem [shape: f32[128,16], index: 2, kind: input, shape index: {}]
  %s3 = inlined_call_operand.hbm [shape: f32[1,1], index: 3, kind: output, shape index: {}]
  %s4 = sld [smem:[#allocation0]]
  $region26: #{tpu_custom_call.1} parent=0
    _
  %s6 = ssub.s32 1, %s4
  %s7 = scalar_select 0, %s6, %s4
  %8 = sst [smem:[#allocation2]] %s0
  $region1: #{tpu_custom_call.1} parent=0
    #allocation3 [shape = 'u8[512]{0}', space=vmem, size = 0x400, scoped, tag = 'output window, operand 0, single buffered']
    #allocation4 [shape = 's32[1]{0}', space=sflag, size = 0x4, scoped, tag = 'scoped memory for tpu_custom_call.1']
    %9 = vsyncpa [#allocation4], 0
    // Predicated region
    $region2: #{tpu_custom_call.1} parent=1 // pred_check
      _
    $region3: #{tpu_custom_call.1} parent=1 // pred_check_branch
      %11 = sbr.rel (0) target = $region5
    $region4: #{tpu_custom_call.1} parent=1 // pred_region
      _
    $region5: #{tpu_custom_call.1} parent=1 // pred_fallthru
      _
    // Predicated region
    $region6: #{tpu_custom_call.1} parent=1 // pred_check
      _
    $region7: #{tpu_custom_call.1} parent=1 // pred_check_branch
      %13 = sbr.rel (0) target = $region9
    $region8: #{tpu_custom_call.1} parent=1 // pred_region
      %s14 = sadd.s32 0, 0
      %p15 = scmp.lt.s32.totalorder %s14, 0
      %s16 = scalar_select %p15, %s14, 0
      %s17 = smul.u32 16, %s16
      %p18 = scmp.lt.s32.totalorder %s17, 15
      %s19 = scalar_select %p18, %s17, 15
      %s20 = smul.addr %s19, 8
      %s21 = scalar_lea.vmem %s1, %s20
      %s22 = sadd.s32 0, 0
      %p23 = scmp.lt.s32.totalorder %s22, 0
      %s24 = scalar_select %p23, %s22, 0
      %s25 = smul.u32 16, %s24
    $region9: #{tpu_custom_call.1} parent=1 // pred_fallthru
      _
    // Predicated region
    $region10: #{tpu_custom_call.1} parent=1 // pred_check
      _
    $region11: #{tpu_custom_call.1} parent=1 // pred_check_branch
      %27 = sbr.rel (0) target = $region13
    $region12: #{tpu_custom_call.1} parent=1 // pred_region
      %s28 = sadd.s32 0, 0
      %p29 = scmp.lt.s32.totalorder %s28, 0
      %s30 = scalar_select %p29, %s28, 0
      %s31 = smul.u32 16, %s30
      %p32 = scmp.lt.s32.totalorder %s31, 15
      %s33 = scalar_select %p32, %s31, 15
      %s34 = smul.addr %s33, 8
      %s35 = scalar_lea.vmem %s2, %s34
      %s36 = sadd.s32 0, 0
      %p37 = scmp.lt.s32.totalorder %s36, 0
      %s38 = scalar_select %p37, %s36, 0
      %s39 = smul.u32 16, %s38
    $region13: #{tpu_custom_call.1} parent=1 // pred_fallthru
      _
    %s40 = sadd.s32 0, 0
    %p41 = scmp.lt.s32.totalorder %s40, 0
    %s42 = scalar_select %p41, %s40, 0
    %s43 = smul.u32 16, %s42
    %p44 = scmp.lt.s32.totalorder %s43, 15
    %s45 = scalar_select %p44, %s43, 15
    %s46 = smul.addr %s45, 8
    %s47 = scalar_lea.vmem %s1, %s46
    %s48 = sadd.s32 0, 0
    %p49 = scmp.lt.s32.totalorder %s48, 0
    %s50 = scalar_select %p49, %s48, 0
    %s51 = smul.u32 16, %s50
    %p52 = scmp.lt.s32.totalorder %s51, 15
    %s53 = scalar_select %p52, %s51, 15
    %s54 = smul.addr %s53, 8
    %s55 = scalar_lea.vmem %s2, %s54
    %s56 = sadd.s32 0, 0
    %p57 = scmp.lt.s32.totalorder %s56, 0
    %s58 = scalar_select %p57, %s56, 0
    %s59 = smul.u32 16, %s58
    %p60 = scmp.lt.s32.totalorder %s59, 15
    %s61 = scalar_select %p60, %s59, 15
    %s62 = smul.addr %s61, 8
    %s63 = scalar_lea.vmem %s1, %s62
    %s64 = sadd.s32 0, 0
    %p65 = scmp.lt.s32.totalorder %s64, 0
    %s66 = scalar_select %p65, %s64, 0
    %s67 = smul.u32 16, %s66
    %s68 = sadd.s32 0, 0
    %p69 = scmp.lt.s32.totalorder %s68, 0
    %s70 = scalar_select %p69, %s68, 0
    %s71 = smul.u32 16, %s70
    %p72 = scmp.lt.s32.totalorder %s71, 15
    %s73 = scalar_select %p72, %s71, 15
    %s74 = smul.addr %s73, 8
    %s75 = scalar_lea.vmem %s2, %s74
    %s76 = sadd.s32 0, 0
    %p77 = scmp.lt.s32.totalorder %s76, 0
    %s78 = scalar_select %p77, %s76, 0
    %s79 = smul.u32 16, %s78
    %p80 = scmp.eq.s32.totalorder 0, 0
    // Predicated region
    $region14: #{tpu_custom_call.1} parent=1 // pred_check
      %p81 = pneg %p80
    $region15: #{tpu_custom_call.1} parent=1 // pred_check_branch
      %83 = sbr.rel (%p81) target = $region17
    $region16: #{tpu_custom_call.1} parent=1 // pred_region
      %vm84 = vcmask 0
      %85 = vst.msk [vmem:[#allocation3] sm:$0x1] %vm84, 0.0
    $region17: #{tpu_custom_call.1} parent=1 // pred_fallthru
      _
    %s86 = sld [smem:[#allocation2]]
    %v87 = vld [vmem:[%s63] sm:$0xff]
    %v88 = vld [vmem:[%s63 + $0x8] sm:$0xff]
    %v89 = vld [vmem:[%s63 + $0x10] sm:$0xff]
    %v90 = vld [vmem:[%s63 + $0x18] sm:$0xff]
    %v91 = vld [vmem:[%s63 + $0x20] sm:$0xff]
    %v92 = vld [vmem:[%s63 + $0x28] sm:$0xff]
    %v93 = vld [vmem:[%s63 + $0x30] sm:$0xff]
    %v94 = vld [vmem:[%s63 + $0x38] sm:$0xff]
    %v95 = vld [vmem:[%s63 + $0x40] sm:$0xff]
    %v96 = vld [vmem:[%s63 + $0x48] sm:$0xff]
    %v97 = vld [vmem:[%s63 + $0x50] sm:$0xff]
    %v98 = vld [vmem:[%s63 + $0x58] sm:$0xff]
    %v99 = vld [vmem:[%s63 + $0x60] sm:$0xff]
    %v100 = vld [vmem:[%s63 + $0x68] sm:$0xff]
    %v101 = vld [vmem:[%s63 + $0x70] sm:$0xff]
    %v102 = vld [vmem:[%s63 + $0x78] sm:$0xff]
    %v103 = vld [vmem:[%s75] sm:$0xff]
    %v104 = vld [vmem:[%s75 + $0x8] sm:$0xff]
    %v105 = vld [vmem:[%s75 + $0x10] sm:$0xff]
    %v106 = vld [vmem:[%s75 + $0x18] sm:$0xff]
    %v107 = vld [vmem:[%s75 + $0x20] sm:$0xff]
    %v108 = vld [vmem:[%s75 + $0x28] sm:$0xff]
    %v109 = vld [vmem:[%s75 + $0x30] sm:$0xff]
    %v110 = vld [vmem:[%s75 + $0x38] sm:$0xff]
    %v111 = vld [vmem:[%s75 + $0x40] sm:$0xff]
    %v112 = vld [vmem:[%s75 + $0x48] sm:$0xff]
    %v113 = vld [vmem:[%s75 + $0x50] sm:$0xff]
    %v114 = vld [vmem:[%s75 + $0x58] sm:$0xff]
    %v115 = vld [vmem:[%s75 + $0x60] sm:$0xff]
    %v116 = vld [vmem:[%s75 + $0x68] sm:$0xff]
    %v117 = vld [vmem:[%s75 + $0x70] sm:$0xff]
    %v118 = vld [vmem:[%s75 + $0x78] sm:$0xff]
    %v119 = vmul.f32 %v87, %v103
    %v120 = vmul.f32 %v88, %v104
    %v121 = vmul.f32 %v89, %v105
    %v122 = vmul.f32 %v90, %v106
    %v123 = vmul.f32 %v91, %v107
    %v124 = vmul.f32 %v92, %v108
    %v125 = vmul.f32 %v93, %v109
    %v126 = vmul.f32 %v94, %v110
    %v127 = vmul.f32 %v95, %v111
    %v128 = vmul.f32 %v96, %v112
    %v129 = vmul.f32 %v97, %v113
    %v130 = vmul.f32 %v98, %v114
    %v131 = vmul.f32 %v99, %v115
    %v132 = vmul.f32 %v100, %v116
    %v133 = vmul.f32 %v101, %v117
    %v134 = vmul.f32 %v102, %v118
    %v135 = vstv %s86
    %v136 = vsub.f32 %v135, %v119
    %v137 = vsub.f32 %v135, %v120
    %v138 = vsub.f32 %v135, %v121
    %v139 = vsub.f32 %v135, %v122
    %v140 = vsub.f32 %v135, %v123
    %v141 = vsub.f32 %v135, %v124
    %v142 = vsub.f32 %v135, %v125
    %v143 = vsub.f32 %v135, %v126
    %v144 = vsub.f32 %v135, %v127
    %v145 = vsub.f32 %v135, %v128
    %v146 = vsub.f32 %v135, %v129
    %v147 = vsub.f32 %v135, %v130
    %v148 = vsub.f32 %v135, %v131
    %v149 = vsub.f32 %v135, %v132
    %v150 = vsub.f32 %v135, %v133
    %v151 = vsub.f32 %v135, %v134
    %v152 = vmax.f32 %v136, 0.0
    %v153 = vmax.f32 %v137, 0.0
    %v154 = vmax.f32 %v138, 0.0
    %v155 = vmax.f32 %v139, 0.0
    %v156 = vmax.f32 %v140, 0.0
    %v157 = vmax.f32 %v141, 0.0
    %v158 = vmax.f32 %v142, 0.0
    %v159 = vmax.f32 %v143, 0.0
    %v160 = vmax.f32 %v144, 0.0
    %v161 = vmax.f32 %v145, 0.0
    %v162 = vmax.f32 %v146, 0.0
    %v163 = vmax.f32 %v147, 0.0
    %v164 = vmax.f32 %v148, 0.0
    %v165 = vmax.f32 %v149, 0.0
    %v166 = vmax.f32 %v150, 0.0
    %v167 = vmax.f32 %v151, 0.0
    %v168 = vld [vmem:[#allocation3] sm:$0x1]
    %vm169 = vcmask 130048
    %v170 = vsel %vm169, %v152, 0.0
    %v171 = vsel %vm169, %v153, 0.0
    %v172 = vadd.f32 %v170, %v171
    %v173 = vsel %vm169, %v154, 0.0
    %v174 = vadd.f32 %v172, %v173
    %v175 = vsel %vm169, %v155, 0.0
    %v176 = vadd.f32 %v174, %v175
    %v177 = vsel %vm169, %v156, 0.0
    %v178 = vadd.f32 %v176, %v177
    %v179 = vsel %vm169, %v157, 0.0
    %v180 = vadd.f32 %v178, %v179
    %v181 = vsel %vm169, %v158, 0.0
    %v182 = vadd.f32 %v180, %v181
    %v183 = vsel %vm169, %v159, 0.0
    %v184 = vadd.f32 %v182, %v183
    %v185 = vsel %vm169, %v160, 0.0
    %v186 = vadd.f32 %v184, %v185
    %v187 = vsel %vm169, %v161, 0.0
    %v188 = vadd.f32 %v186, %v187
    %v189 = vsel %vm169, %v162, 0.0
    %v190 = vadd.f32 %v188, %v189
    %v191 = vsel %vm169, %v163, 0.0
    %v192 = vadd.f32 %v190, %v191
    %v193 = vsel %vm169, %v164, 0.0
    %v194 = vadd.f32 %v192, %v193
    %v195 = vsel %vm169, %v165, 0.0
    %v196 = vadd.f32 %v194, %v195
    %v197 = vsel %vm169, %v166, 0.0
    %v198 = vadd.f32 %v196, %v197
    %v199 = vsel %vm169, %v167, 0.0
    %v200 = vadd.f32 %v198, %v199
    %201 = vadd.xlane.f32.xlu0 %v200
    %v202 = vpop.xlane.xlu0 %201
    %v203 = vrot.slane %v202, 4
    %v204 = vadd.f32 %v202, %v203
    %v205 = vrot.slane %v204, 2
    %v206 = vadd.f32 %v204, %v205
    %v207 = vrot.slane %v206, 1
    %v208 = vadd.f32 %v206, %v207
    %s209 = vtos %v208
    %v210 = vstv %s209
    %v211 = vadd.f32 %v168, %v210
    %vm212 = vcmask 0
    %213 = vst.msk [vmem:[#allocation3] sm:$0x1] %vm212, %v211
    // Predicated region
    $region18: #{tpu_custom_call.1} parent=1 // pred_check
      _
    $region19: #{tpu_custom_call.1} parent=1 // pred_check_branch
      %215 = sbr.rel (0) target = $region21
    $region20: #{tpu_custom_call.1} parent=1 // pred_region
      %s217 = ssub.s32 16, 16
      %218 = vsyncadd [#allocation4], %s217
      %s220 = sshll.u32 [#allocation3], 4
      %s221 = int_to_ptr.vmem [resolvable:$true] %s220
      %223 = dma.vmem_to_hbm [thread:$0]  %s221, 16, %s3, [#allocation4]
    $region21: #{tpu_custom_call.1} parent=1 // pred_fallthru
      _
    // Predicated region
    $region22: #{tpu_custom_call.1} parent=1 // pred_check
      _
    $region23: #{tpu_custom_call.1} parent=1 // pred_check_branch
      %225 = sbr.rel (0) target = $region25
    $region24: #{tpu_custom_call.1} parent=1 // pred_region
      %226 = dma.done [#allocation4], 16
    $region25: #{tpu_custom_call.1} parent=1 // pred_fallthru
      _
    %227 = vsyncpa [#allocation4], 1

</llo_original>
